<compile_context>
chip_gen: v6e
topology: v6e:2x2x1
jax: 0.10.0
libtpu: 0.0.40
codegen_flags: <defaults>
</compile_context>

<pallas_src>
import jax
import jax.numpy as jnp
from jax.experimental import pallas as pl
from jax.experimental.pallas import tpu as pltpu


def _scale_mul_kernel(scale_ref, gf_ref, out_ref):
    # scale_ref: (ROW_TILE, 1)          per-(batch, channel) scale
    # gf_ref:    (ROW_TILE, LANE_TILE)  flattened feature tile
    # out_ref:   (ROW_TILE, LANE_TILE)
    out_ref[...] = (gf_ref[...] * scale_ref[...]).astype(out_ref.dtype)


def _pick_tile(extent, align, max_tile):
    """Largest multiple of `align` that divides `extent` and is <= max_tile.

    Falls back to the full extent, which is always a legal block shape."""
    best = None
    t = align
    limit = min(extent, max_tile)
    while t <= limit:
        if extent % t == 0:
            best = t
        t += align
    return best if best is not None else extent


# ~2 MiB per gf block => (2 bufs) x (in + out) ~= 8 MiB pipelined footprint,
# safe under the scoped-VMEM default on v5e / v6e / v7x.
_MAX_GF_BLOCK_BYTES = 2 * 1024 * 1024


def channel_attention(global_features, instance_params, weight, bias):
    """
    global_features: (B, C, H, W) float32 (NCHW)
    instance_params: (B, Cin)     float32
    weight:          (C, Cin)     float32   (nn.Linear weight)
    bias:            (C,)         float32   (nn.Linear bias)
    returns:         (B, C, H, W) float32
    """
    B, C, H, W = global_features.shape
    HW = H * W
    rows = B * C
    dtype = global_features.dtype
    itemsize = jnp.dtype(dtype).itemsize

    # Hoisted Linear: tiny (B, Cin) x (Cin, C) matmul; XLA handles it and the
    # kernel never re-executes it per grid step.
    scale = (instance_params @ weight.T + bias).astype(dtype)   # (B, C)

    gf2d = global_features.reshape(rows, HW)
    scale2d = scale.reshape(rows, 1)

    row_tile = _pick_tile(rows, 8, 256)
    lane_budget = max(128, _MAX_GF_BLOCK_BYTES // (row_tile * itemsize))
    lane_tile = _pick_tile(HW, 128, lane_budget)

    grid = (rows // row_tile, HW // lane_tile)

    cost = pl.CostEstimate(
        flops=rows * HW,
        transcendentals=0,
        bytes_accessed=2 * rows * HW * itemsize + rows * itemsize,
    )

    out2d = pl.pallas_call(
        _scale_mul_kernel,
        out_shape=jax.ShapeDtypeStruct((rows, HW), dtype),
        grid=grid,
        in_specs=[
            pl.BlockSpec((row_tile, 1), lambda r, l: (r, 0)),
            pl.BlockSpec((row_tile, lane_tile), lambda r, l: (r, l)),
        ],
        out_specs=pl.BlockSpec((row_tile, lane_tile), lambda r, l: (r, l)),
        compiler_params=pltpu.CompilerParams(
            dimension_semantics=("parallel", "parallel"),
        ),
        cost_estimate=cost,
    )(scale2d, gf2d)

    return out2d.reshape(B, C, H, W)


if __name__ == "__main__":
    key = jax.random.PRNGKey(0)
    k_gf, k_ip, k_w, k_b = jax.random.split(key, 4)

    B, C, H, W = 2, 4, 16, 16   # out_channels = C
    Cin = 8                     # in_channels

    global_features = jax.random.normal(k_gf, (B, C, H, W), dtype=jnp.float32)
    instance_params = jax.random.normal(k_ip, (B, Cin), dtype=jnp.float32)

    # Deterministic nn.Linear-style init (uniform in +/- 1/sqrt(Cin)).
    bound = 1.0 / (Cin ** 0.5)
    weight = jax.random.uniform(k_w, (C, Cin), jnp.float32, -bound, bound)
    bias = jax.random.uniform(k_b, (C,), jnp.float32, -bound, bound)

    out = channel_attention(global_features, instance_params, weight, bias)
    out = jax.block_until_ready(out)

    # Pure-JAX reference check.
    scale_ref = instance_params @ weight.T + bias            # (B, C)
    ref = global_features * scale_ref.reshape(B, C, 1, 1)
    assert out.shape == (B, C, H, W)
    assert jnp.allclose(out, ref, atol=1e-5, rtol=1e-5), "mismatch vs reference"

    print("KERNEL_OK")
</pallas_src>

<mosaic_0001>
module attributes {stable_mosaic.version = 11 : i64} {
  func.func @_scale_mul_kernel(%arg0: i32, %arg1: i32, %arg2: memref<8x1xf32, #tpu.memory_space<vmem>>, %arg3: memref<8x256xf32, #tpu.memory_space<vmem>>, %arg4: memref<8x256xf32, #tpu.memory_space<vmem>>) attributes {dimension_semantics = [#tpu.dimension_semantics<parallel>, #tpu.dimension_semantics<parallel>], iteration_bounds = array<i64: 1, 1>, scalar_prefetch = 0 : i64, scratch_operands = 0 : i64, tpu.core_type = #tpu.core_type<tc>, window_params = [{transform_indices = @transform_0, window_bounds = array<i64: 8, 1>}, {transform_indices = @transform_1, window_bounds = array<i64: 8, 256>}, {transform_indices = @transform_2, window_bounds = array<i64: 8, 256>}]} {
    %c0 = arith.constant 0 : index
    %c0_0 = arith.constant 0 : index
    %0 = vector.load %arg3[%c0, %c0_0] : memref<8x256xf32, #tpu.memory_space<vmem>>, vector<8x256xf32>
    %c0_1 = arith.constant 0 : index
    %c0_2 = arith.constant 0 : index
    %1 = vector.load %arg2[%c0_1, %c0_2] : memref<8x1xf32, #tpu.memory_space<vmem>>, vector<8x1xf32>
    %2 = vector.broadcast %1 : vector<8x1xf32> to vector<8x256xf32>
    %3 = arith.mulf %0, %2 : vector<8x256xf32>
    %c0_3 = arith.constant 0 : index
    %c0_4 = arith.constant 0 : index
    %4 = vector.load %arg4[%c0_3, %c0_4] : memref<8x256xf32, #tpu.memory_space<vmem>>, vector<8x256xf32>
    tpu.vector_store %arg4[%c0_3, %c0_4], %3 {strides = array<i32>} : memref<8x256xf32, #tpu.memory_space<vmem>>, vector<8x256xf32>,
    return
  }
  func.func @transform_0(%arg0: i32, %arg1: i32) -> (i32, i32) {
    %c0_i32 = arith.constant 0 : i32
    %c0_i32_0 = arith.constant 0 : i32
    return %arg0, %c0_i32 : i32, i32
  }
  func.func @transform_1(%arg0: i32, %arg1: i32) -> (i32, i32) {
    %c0_i32 = arith.constant 0 : i32
    return %arg0, %arg1 : i32, i32
  }
  func.func @transform_2(%arg0: i32, %arg1: i32) -> (i32, i32) {
    %c0_i32 = arith.constant 0 : i32
    return %arg0, %arg1 : i32, i32
  }
}

</mosaic_0001>

<llo_original>
// kernel: tpu_custom_call.1
$region0: #{tpu_custom_call.1}
  #allocation0 [shape = 'u32[]', space=smem, size = 0x4, offset = 0x4, fixed_abs, tag = 'smem constant byte address 0x4 - core index']
  #allocation1 [shape = 'u32[144,128]{1,0:T(1,128)}', space=vmem, size = 0x12000, scoped, tag = 'internal scratch']
  %s0 = inlined_call_operand.vmem [shape: f32[8,1], index: 0, kind: input, shape index: {}]
  %s1 = inlined_call_operand.hbm [shape: f32[8,256], index: 1, kind: input, shape index: {}]
  %s2 = inlined_call_operand.hbm [shape: f32[8,256], index: 2, kind: output, shape index: {}]
  %s3 = sld [smem:[#allocation0]]
  $region22: #{tpu_custom_call.1} parent=0
    _
  %s5 = ssub.s32 1, %s3
  %s6 = scalar_select 0, %s5, %s3
  $region1: #{tpu_custom_call.1} parent=0
    #allocation2 [shape = 'u8[8192]{0}', space=vmem, size = 0x2000, scoped, tag = 'input window, operand 1, single buffered']
    #allocation3 [shape = 's32[1]{0}', space=sflag, size = 0x4, scoped, tag = 'scoped memory for tpu_custom_call.1']
    #allocation4 [shape = 's32[1]{0}', space=sflag, size = 0x4, scoped, tag = 'scoped memory for tpu_custom_call.1']
    #allocation5 [shape = 'u8[8192]{0}', space=vmem, size = 0x2000, scoped, tag = 'output window, operand 0, single buffered']
    %7 = vsyncpa [#allocation3], 0
    %8 = vsyncpa [#allocation4], 0
    // Predicated region
    $region2: #{tpu_custom_call.1} parent=1 // pred_check
      _
    $region3: #{tpu_custom_call.1} parent=1 // pred_check_branch
      %10 = sbr.rel (0) target = $region5
    $region4: #{tpu_custom_call.1} parent=1 // pred_region
      _
    $region5: #{tpu_custom_call.1} parent=1 // pred_fallthru
      _
    // Predicated region
    $region6: #{tpu_custom_call.1} parent=1 // pred_check
      _
    $region7: #{tpu_custom_call.1} parent=1 // pred_check_branch
      %12 = sbr.rel (0) target = $region9
    $region8: #{tpu_custom_call.1} parent=1 // pred_region
      %s14 = ssub.s32 256, 256
      %15 = vsyncadd [#allocation3], %s14
      %s17 = sshll.u32 [#allocation2], 4
      %s18 = int_to_ptr.vmem [resolvable:$true] %s17
      %20 = dma.hbm_to_vmem [thread:$0]  %s1, 256, %s18, [#allocation3]
    $region9: #{tpu_custom_call.1} parent=1 // pred_fallthru
      _
    // Predicated region
    $region10: #{tpu_custom_call.1} parent=1 // pred_check
      _
    $region11: #{tpu_custom_call.1} parent=1 // pred_check_branch
      %22 = sbr.rel (0) target = $region13
    $region12: #{tpu_custom_call.1} parent=1 // pred_region
      %23 = dma.done [#allocation3], 256
    $region13: #{tpu_custom_call.1} parent=1 // pred_fallthru
      _
    %v24 = vld [vmem:[#allocation2] sm:$0xff]
    %v25 = vld [vmem:[#allocation2 + $0x8] sm:$0xff]
    %v26 = vld [vmem:[%s0] sm:$0xff]
    %28 = vset.pattern.permute.xlu0 0
    %29 = vperm.xlu0 %28, %v26
    %v30 = vpop.permute.xlu0 %29
    %v32 = vmul.f32 %v24, %v30
    %v33 = vmul.f32 %v25, %v30
    %34 = vst [vmem:[#allocation5] sm:$0xff] %v32
    %35 = vst [vmem:[#allocation5 + $0x8] sm:$0xff] %v33
    // Predicated region
    $region14: #{tpu_custom_call.1} parent=1 // pred_check
      _
    $region15: #{tpu_custom_call.1} parent=1 // pred_check_branch
      %37 = sbr.rel (0) target = $region17
    $region16: #{tpu_custom_call.1} parent=1 // pred_region
      %s39 = ssub.s32 256, 256
      %40 = vsyncadd [#allocation4], %s39
      %s42 = sshll.u32 [#allocation5], 4
      %s43 = int_to_ptr.vmem [resolvable:$true] %s42
      %45 = dma.vmem_to_hbm [thread:$0]  %s43, 256, %s2, [#allocation4]
    $region17: #{tpu_custom_call.1} parent=1 // pred_fallthru
      _
    // Predicated region
    $region18: #{tpu_custom_call.1} parent=1 // pred_check
      _
    $region19: #{tpu_custom_call.1} parent=1 // pred_check_branch
      %47 = sbr.rel (0) target = $region21
    $region20: #{tpu_custom_call.1} parent=1 // pred_region
      %48 = dma.done [#allocation4], 256
    $region21: #{tpu_custom_call.1} parent=1 // pred_fallthru
      _
    %49 = vsyncpa [#allocation3], 1
    %50 = vsyncpa [#allocation4], 1

</llo_original>
